<compile_context>
chip_gen: v5e
topology: v5e:2x2
jax: 0.10.0
libtpu: 0.0.40
codegen_flags: <defaults>
</compile_context>

<pallas_src>
import functools

import jax
import jax.numpy as jnp
from jax.experimental import pallas as pl
from jax.experimental.pallas import tpu as pltpu

NEG_SLOPE = 0.01  # PyTorch nn.LeakyReLU default
LANE = 128
SUBLANE = 8


def _round_up(x, m):
    return ((x + m - 1) // m) * m


# ---------------------------------------------------------------------------
# Fused kernel: all residual blocks + final linear in one body.
#   args = (w0, b0, w1, b1, ..., w_out, b_out, o_ref)
#   has_proj = static tuple of bools, one per residual block
# ---------------------------------------------------------------------------
def _fused_kernel(x_ref, *args, has_proj):
    o_ref = args[-1]
    refs = args[:-1]

    fea = x_ref[...]  # [rows, d_in] f32 (logical width, no padding streamed)
    ri = 0
    for proj in has_proj:
        w = refs[ri][...]          # bf16 [c_in, n] or [c_in, 2*n]
        b = refs[ri + 1][...]      # f32  [1, n]
        ri += 2
        hr = jnp.dot(fea.astype(jnp.bfloat16), w,
                     preferred_element_type=jnp.float32)
        if proj:
            # One MXU matmul serves both fc and res_fc; split at a 128-lane
            # boundary (n is a multiple of 128 by construction) -> free.
            n = hr.shape[1] // 2
            h, r = hr[:, :n], hr[:, n:]
        else:
            h, r = hr, fea         # identity residual, stays f32
        h = h + b
        fea = jnp.where(h > 0.0, h, NEG_SLOPE * h) + r

    w_out = refs[ri][...]          # bf16 [c_last, out_dim]
    b_out = refs[ri + 1][...]      # f32  [1, out_dim]
    out = jnp.dot(fea.astype(jnp.bfloat16), w_out,
                  preferred_element_type=jnp.float32) + b_out
    o_ref[...] = out.astype(o_ref.dtype)


# ---------------------------------------------------------------------------
# One-time parameter preparation (hoisted out of the per-call path):
# pad / fuse / bf16-cast the weights, track the "carried" activation width.
# ---------------------------------------------------------------------------
def prepare_params(params):
    flat = []
    has_proj = []
    if params["fcs"]:
        in_dim = params["fcs"][0][0].shape[0]
    else:
        in_dim = params["fc_out"][0].shape[0]
    carried = in_dim  # width of the activation entering the current layer

    for (w, b), w_res in zip(params["fcs"], params["res_fcs"]):
        d_in, d_out = w.shape
        if w_res is not None:
            # projection block: fuse [W | W_res], pad output to 128 lanes so the
            # in-kernel split lands on a vreg boundary
            n = _round_up(d_out, LANE)
            w_p = jnp.zeros((carried, 2 * n), jnp.float32)
            w_p = w_p.at[:d_in, :d_out].set(w).at[:d_in, n:n + d_out].set(w_res)
            b_p = jnp.zeros((1, n), jnp.float32).at[:, :d_out].set(b)
            flat += [w_p.astype(jnp.bfloat16), b_p]
            has_proj.append(True)
            carried = n
        else:
            # identity block: keep the carried width, no split needed
            w_p = jnp.zeros((carried, carried), jnp.float32).at[:d_in, :d_out].set(w)
            b_p = jnp.zeros((1, carried), jnp.float32).at[:, :d_out].set(b)
            flat += [w_p.astype(jnp.bfloat16), b_p]
            has_proj.append(False)

    w_out, b_out = params["fc_out"]
    d_last, out_dim = w_out.shape
    # final weight: pad rows to the carried width, keep the logical output dim
    wo_p = jnp.zeros((carried, out_dim), jnp.float32).at[:d_last, :].set(w_out)
    bo_p = jnp.asarray(b_out, jnp.float32).reshape(1, out_dim)
    flat += [wo_p.astype(jnp.bfloat16), bo_p]

    return {
        "flat": tuple(flat),
        "has_proj": tuple(has_proj),
        "in_dim": in_dim,
        "out_dim": out_dim,
    }


def _pick_row_tile(n, max_row_tile):
    """Multiple-of-8 row tile: >=2 grid steps when possible (v7x 2 TCs) and
    tiles balanced so the last (clipped) tile wastes little work."""
    if n <= SUBLANE:
        return n  # full-dim block is always legal
    n_tiles = max(2, pl.cdiv(n, max_row_tile))
    rt = _round_up(pl.cdiv(n, n_tiles), SUBLANE)
    return min(rt, _round_up(max_row_tile, SUBLANE))


# ---------------------------------------------------------------------------
# Wrapper: build specs, single pallas_call over a batch-row grid.
# For repeated calls wrap this in jax.jit (prepared weights are ordinary
# arrays and trace cleanly).
# ---------------------------------------------------------------------------
def residual_network_forward(prepared, fea, *, max_row_tile=1024):
    flat = prepared["flat"]
    has_proj = prepared["has_proj"]
    out_dim = prepared["out_dim"]

    fea = jnp.asarray(fea, jnp.float32)
    n, d_in = fea.shape
    assert d_in == prepared["in_dim"], (d_in, prepared["in_dim"])

    rt = _pick_row_tile(n, max_row_tile)
    grid = (pl.cdiv(n, rt),)  # ragged edge handled by clipped blocks

    # activation streams with its logical last dim (full-dim -> legal even <128)
    in_specs = [pl.BlockSpec((rt, d_in), lambda i: (i, 0))]
    for wa in flat:
        # Full-array block, constant index -> weight stays VMEM-resident
        # across all batch-grid iterations.
        in_specs.append(pl.BlockSpec(wa.shape, lambda i: (0, 0)))
    out_spec = pl.BlockSpec((rt, out_dim), lambda i: (i, 0))

    # Explicit VMEM budget from actual block sizes (2x buffers for streaming
    # activations, 2x for weights since they are default double-buffered,
    # plus headroom for f32 temporaries inside the body).
    weight_bytes = sum(int(a.size) * a.dtype.itemsize for a in flat)
    max_w = max([d_in] + [int(w.shape[1]) for w in flat[0::2]])
    act_bytes = rt * d_in * 4 + rt * out_dim * 4
    vmem_needed = 2 * act_bytes + 2 * weight_bytes + 6 * rt * max_w * 4 + (2 << 20)
    vmem_limit = int(min(max(vmem_needed, 16 << 20), 64 << 20))

    kernel = functools.partial(_fused_kernel, has_proj=has_proj)
    return pl.pallas_call(
        kernel,
        out_shape=jax.ShapeDtypeStruct((n, out_dim), jnp.float32),
        grid=grid,
        in_specs=in_specs,
        out_specs=out_spec,
        compiler_params=pltpu.CompilerParams(
            dimension_semantics=("parallel",),   # shard batch across TCs (v7x)
            vmem_limit_bytes=vmem_limit,
        ),
    )(fea, *flat)


# ---------------------------------------------------------------------------
# Parameter construction (deterministic, mirrors nn.Linear shapes)
# ---------------------------------------------------------------------------
def init_params(key, input_dim, output_dim, hidden_layer_dims):
    dims = [input_dim] + list(hidden_layer_dims)
    params = {"fcs": [], "res_fcs": [], "fc_out": None}
    for i in range(len(dims) - 1):
        d_in, d_out = dims[i], dims[i + 1]
        key, k1, k2, k3 = jax.random.split(key, 4)
        bound = 1.0 / jnp.sqrt(d_in)
        # stored as [d_in, d_out] == transpose of PyTorch's [d_out, d_in]
        w = jax.random.uniform(k1, (d_in, d_out), jnp.float32, -bound, bound)
        b = jax.random.uniform(k2, (1, d_out), jnp.float32, -bound, bound)
        params["fcs"].append((w, b))
        if d_in != d_out:
            w_res = jax.random.uniform(k3, (d_in, d_out), jnp.float32, -bound, bound)
        else:
            w_res = None  # nn.Identity
        params["res_fcs"].append(w_res)
    d_last = dims[-1]
    key, k1, k2 = jax.random.split(key, 3)
    bound = 1.0 / jnp.sqrt(d_last)
    w_out = jax.random.uniform(k1, (d_last, output_dim), jnp.float32, -bound, bound)
    b_out = jax.random.uniform(k2, (1, output_dim), jnp.float32, -bound, bound)
    params["fc_out"] = (w_out, b_out)
    return params


# Pure-JAX f32 reference for correctness checking
def residual_network_ref(params, fea):
    for (w, b), w_res in zip(params["fcs"], params["res_fcs"]):
        h = fea @ w + b
        h = jnp.where(h > 0, h, NEG_SLOPE * h)
        r = fea if w_res is None else fea @ w_res
        fea = h + r
    w_out, b_out = params["fc_out"]
    return fea @ w_out + b_out


if __name__ == "__main__":
    key = jax.random.PRNGKey(0)
    k_param, k_x = jax.random.split(key)

    input_dim = 32
    output_dim = 8
    hidden_layer_dims = [32, 64]   # first block: identity residual, second: projection
    batch = 16

    params = init_params(k_param, input_dim, output_dim, hidden_layer_dims)
    prepared = prepare_params(params)           # one-time weight prep
    x = jax.random.normal(k_x, (batch, input_dim), jnp.float32)

    out = jax.block_until_ready(residual_network_forward(prepared, x))
    ref = residual_network_ref(params, x)

    assert out.shape == (batch, output_dim), out.shape
    # bf16 matmul inputs with f32 accumulation -> loosened tolerance vs f32 ref
    assert jnp.allclose(out, ref, atol=3e-2, rtol=3e-2), "mismatch vs reference"
    print("KERNEL_OK")
</pallas_src>

<mosaic_0001>
module attributes {stable_mosaic.version = 11 : i64} {
  func.func @_fused_kernel(%arg0: i32, %arg1: memref<8x32xf32, #tpu.memory_space<vmem>>, %arg2: memref<32x32xbf16, #tpu.memory_space<vmem>>, %arg3: memref<1x32xf32, #tpu.memory_space<vmem>>, %arg4: memref<32x256xbf16, #tpu.memory_space<vmem>>, %arg5: memref<1x128xf32, #tpu.memory_space<vmem>>, %arg6: memref<128x8xbf16, #tpu.memory_space<vmem>>, %arg7: memref<1x8xf32, #tpu.memory_space<vmem>>, %arg8: memref<8x8xf32, #tpu.memory_space<vmem>>) attributes {dimension_semantics = [#tpu.dimension_semantics<parallel>], iteration_bounds = array<i64: 2>, scalar_prefetch = 0 : i64, scratch_operands = 0 : i64, tpu.core_type = #tpu.core_type<tc>, window_params = [{transform_indices = @transform_0, window_bounds = array<i64: 8, 32>}, {pipeline_mode = #tpu.pipeline_mode<synchronous>, transform_indices = @transform_1, window_bounds = array<i64: 32, 32>}, {pipeline_mode = #tpu.pipeline_mode<synchronous>, transform_indices = @transform_2, window_bounds = array<i64: 1, 32>}, {pipeline_mode = #tpu.pipeline_mode<synchronous>, transform_indices = @transform_3, window_bounds = array<i64: 32, 256>}, {pipeline_mode = #tpu.pipeline_mode<synchronous>, transform_indices = @transform_4, window_bounds = array<i64: 1, 128>}, {pipeline_mode = #tpu.pipeline_mode<synchronous>, transform_indices = @transform_5, window_bounds = array<i64: 128, 8>}, {pipeline_mode = #tpu.pipeline_mode<synchronous>, transform_indices = @transform_6, window_bounds = array<i64: 1, 8>}, {transform_indices = @transform_7, window_bounds = array<i64: 8, 8>}]} {
    %c0 = arith.constant 0 : index
    %c0_0 = arith.constant 0 : index
    %0 = vector.load %arg1[%c0, %c0_0] : memref<8x32xf32, #tpu.memory_space<vmem>>, vector<8x32xf32>
    %c0_1 = arith.constant 0 : index
    %c0_2 = arith.constant 0 : index
    %1 = vector.load %arg2[%c0_1, %c0_2] : memref<32x32xbf16, #tpu.memory_space<vmem>>, vector<32x32xbf16>
    %c0_3 = arith.constant 0 : index
    %c0_4 = arith.constant 0 : index
    %2 = vector.load %arg3[%c0_3, %c0_4] : memref<1x32xf32, #tpu.memory_space<vmem>>, vector<1x32xf32>
    %3 = arith.truncf %0 : vector<8x32xf32> to vector<8x32xbf16>
    %cst = arith.constant dense<0.000000e+00> : vector<8x32xf32>
    %4 = tpu.matmul %3, %1, %cst {dimension_numbers = #tpu.dot_dimension_numbers<[1], [0], [0], [1], [0, 0, 1, 1], [], []>} : vector<8x32xbf16>, vector<32x32xbf16>, vector<8x32xf32> -> vector<8x32xf32>
    %5 = vector.broadcast %2 : vector<1x32xf32> to vector<8x32xf32>
    %6 = arith.addf %4, %5 : vector<8x32xf32>
    %cst_5 = arith.constant 0.000000e+00 : f32
    %7 = vector.broadcast %cst_5 : f32 to vector<8x32xf32>
    %8 = arith.cmpf ogt, %6, %7 : vector<8x32xf32>
    %cst_6 = arith.constant 0.00999999977 : f32
    %9 = vector.broadcast %cst_6 : f32 to vector<8x32xf32>
    %10 = arith.mulf %9, %6 : vector<8x32xf32>
    %11 = arith.select %8, %6, %10 : vector<8x32xi1>, vector<8x32xf32>
    %12 = arith.addf %11, %0 : vector<8x32xf32>
    %c0_7 = arith.constant 0 : index
    %c0_8 = arith.constant 0 : index
    %13 = vector.load %arg4[%c0_7, %c0_8] : memref<32x256xbf16, #tpu.memory_space<vmem>>, vector<32x256xbf16>
    %c0_9 = arith.constant 0 : index
    %c0_10 = arith.constant 0 : index
    %14 = vector.load %arg5[%c0_9, %c0_10] : memref<1x128xf32, #tpu.memory_space<vmem>>, vector<1x128xf32>
    %15 = arith.truncf %12 : vector<8x32xf32> to vector<8x32xbf16>
    %cst_11 = arith.constant dense<0.000000e+00> : vector<8x256xf32>
    %16 = tpu.matmul %15, %13, %cst_11 {dimension_numbers = #tpu.dot_dimension_numbers<[1], [0], [0], [1], [0, 0, 1, 1], [], []>} : vector<8x32xbf16>, vector<32x256xbf16>, vector<8x256xf32> -> vector<8x256xf32>
    %17 = vector.extract_strided_slice %16 {offsets = [0, 0], sizes = [8, 128], strides = [1, 1]} : vector<8x256xf32> to vector<8x128xf32>
    %18 = vector.extract_strided_slice %16 {offsets = [0, 128], sizes = [8, 128], strides = [1, 1]} : vector<8x256xf32> to vector<8x128xf32>
    %19 = vector.broadcast %14 : vector<1x128xf32> to vector<8x128xf32>
    %20 = arith.addf %17, %19 : vector<8x128xf32>
    %cst_12 = arith.constant 0.000000e+00 : f32
    %21 = vector.broadcast %cst_12 : f32 to vector<8x128xf32>
    %22 = arith.cmpf ogt, %20, %21 : vector<8x128xf32>
    %cst_13 = arith.constant 0.00999999977 : f32
    %23 = vector.broadcast %cst_13 : f32 to vector<8x128xf32>
    %24 = arith.mulf %23, %20 : vector<8x128xf32>
    %25 = arith.select %22, %20, %24 : vector<8x128xi1>, vector<8x128xf32>
    %26 = arith.addf %25, %18 : vector<8x128xf32>
    %c0_14 = arith.constant 0 : index
    %c0_15 = arith.constant 0 : index
    %27 = vector.load %arg6[%c0_14, %c0_15] : memref<128x8xbf16, #tpu.memory_space<vmem>>, vector<128x8xbf16>
    %c0_16 = arith.constant 0 : index
    %c0_17 = arith.constant 0 : index
    %28 = vector.load %arg7[%c0_16, %c0_17] : memref<1x8xf32, #tpu.memory_space<vmem>>, vector<1x8xf32>
    %29 = arith.truncf %26 : vector<8x128xf32> to vector<8x128xbf16>
    %cst_18 = arith.constant dense<0.000000e+00> : vector<8x8xf32>
    %30 = tpu.matmul %29, %27, %cst_18 {dimension_numbers = #tpu.dot_dimension_numbers<[1], [0], [0], [1], [0, 0, 1, 1], [], []>} : vector<8x128xbf16>, vector<128x8xbf16>, vector<8x8xf32> -> vector<8x8xf32>
    %31 = vector.broadcast %28 : vector<1x8xf32> to vector<8x8xf32>
    %32 = arith.addf %30, %31 : vector<8x8xf32>
    %c0_19 = arith.constant 0 : index
    %c0_20 = arith.constant 0 : index
    %33 = vector.load %arg8[%c0_19, %c0_20] : memref<8x8xf32, #tpu.memory_space<vmem>>, vector<8x8xf32>
    tpu.vector_store %arg8[%c0_19, %c0_20], %32 {strides = array<i32>} : memref<8x8xf32, #tpu.memory_space<vmem>>, vector<8x8xf32>,
    return
  }
  func.func @transform_0(%arg0: i32) -> (i32, i32) {
    %c0_i32 = arith.constant 0 : i32
    %c0_i32_0 = arith.constant 0 : i32
    return %arg0, %c0_i32 : i32, i32
  }
  func.func @transform_1(%arg0: i32) -> (i32, i32) {
    %c0_i32 = arith.constant 0 : i32
    %c0_i32_0 = arith.constant 0 : i32
    %c0_i32_1 = arith.constant 0 : i32
    return %c0_i32, %c0_i32_0 : i32, i32
  }
  func.func @transform_2(%arg0: i32) -> (i32, i32) {
    %c0_i32 = arith.constant 0 : i32
    %c0_i32_0 = arith.constant 0 : i32
    %c0_i32_1 = arith.constant 0 : i32
    return %c0_i32, %c0_i32_0 : i32, i32
  }
  func.func @transform_3(%arg0: i32) -> (i32, i32) {
    %c0_i32 = arith.constant 0 : i32
    %c0_i32_0 = arith.constant 0 : i32
    %c0_i32_1 = arith.constant 0 : i32
    return %c0_i32, %c0_i32_0 : i32, i32
  }
  func.func @transform_4(%arg0: i32) -> (i32, i32) {
    %c0_i32 = arith.constant 0 : i32
    %c0_i32_0 = arith.constant 0 : i32
    %c0_i32_1 = arith.constant 0 : i32
    return %c0_i32, %c0_i32_0 : i32, i32
  }
  func.func @transform_5(%arg0: i32) -> (i32, i32) {
    %c0_i32 = arith.constant 0 : i32
    %c0_i32_0 = arith.constant 0 : i32
    %c0_i32_1 = arith.constant 0 : i32
    return %c0_i32, %c0_i32_0 : i32, i32
  }
  func.func @transform_6(%arg0: i32) -> (i32, i32) {
    %c0_i32 = arith.constant 0 : i32
    %c0_i32_0 = arith.constant 0 : i32
    %c0_i32_1 = arith.constant 0 : i32
    return %c0_i32, %c0_i32_0 : i32, i32
  }
  func.func @transform_7(%arg0: i32) -> (i32, i32) {
    %c0_i32 = arith.constant 0 : i32
    %c0_i32_0 = arith.constant 0 : i32
    return %arg0, %c0_i32 : i32, i32
  }
}

</mosaic_0001>

<llo_original>
// kernel: tpu_custom_call.1
$region0: #{tpu_custom_call.1}
  #allocation0 [shape = 'u32[]', space=smem, size = 0x4, offset = 0x4, fixed_abs, tag = 'smem constant byte address 0x4 - core index']
  #allocation1 [shape = 'u32[72,128]{1,0:T(1,128)}', space=vmem, size = 0x9000, scoped, tag = 'internal scratch']
  %s0 = inlined_call_operand.vmem [shape: f32[16,32], index: 0, kind: input, shape index: {}]
  %s1 = inlined_call_operand.vmem [shape: bf16[32,32], index: 1, kind: input, shape index: {}]
  %s2 = inlined_call_operand.vmem [shape: f32[1,32], index: 2, kind: input, shape index: {}]
  %s3 = inlined_call_operand.vmem [shape: bf16[32,256], index: 3, kind: input, shape index: {}]
  %s4 = inlined_call_operand.vmem [shape: f32[1,128], index: 4, kind: input, shape index: {}]
  %s5 = inlined_call_operand.vmem [shape: bf16[128,8], index: 5, kind: input, shape index: {}]
  %s6 = inlined_call_operand.vmem [shape: f32[1,8], index: 6, kind: input, shape index: {}]
  %s7 = inlined_call_operand.vmem [shape: f32[16,8], index: 7, kind: output, shape index: {}]
  %s8 = sld [smem:[#allocation0]]
  $region61: #{tpu_custom_call.1} parent=0
    _
  %s10 = ssub.s32 1, %s8
  %s11 = scalar_select 0, %s10, %s8
  loop: start=0, step=1, limit=4
  $region2: #{tpu_custom_call.1} parent=0 // loop_pre_header
    _
  $region3: #{tpu_custom_call.1} parent=0 // loop_header
    %s13 = sphi 0, %s17
    %p14 = scmp.ge.s32.totalorder %s13, 4
    %s23 = sphi 0, %s25
    %s26 = sphi 0, %s23
    %s27 = sphi 0, %s26
    %s43 = sphi 0, %s27
    %s47 = sphi 0, %s47
    %s49 = sphi 0, %s47
    %s50 = sphi 0, %s49
    %s64 = sphi 0, %s50
    %s68 = sphi 0, %s68
    %s70 = sphi 0, %s68
    %s71 = sphi 0, %s70
    %s85 = sphi 0, %s71
    %s89 = sphi 0, %s89
    %s91 = sphi 0, %s89
    %s92 = sphi 0, %s91
    %s106 = sphi 0, %s92
    %s110 = sphi 0, %s110
    %s112 = sphi 0, %s110
    %s113 = sphi 0, %s112
    %s127 = sphi 0, %s113
    %s131 = sphi 0, %s131
    %s133 = sphi 0, %s131
    %s134 = sphi 0, %s133
    %s148 = sphi 0, %s134
    %s152 = sphi 0, %s152
    %s154 = sphi 0, %s152
    %s155 = sphi 0, %s154
    %s169 = sphi 0, %s155
    %s175 = sphi 0, %s177
    %s178 = sphi 0, %s175
    %s179 = sphi 0, %s178
    %s195 = sphi 0, %s179
  $region4: #{tpu_custom_call.1} parent=0 // loop_header_branch
    %16 = sbr.rel (%p14) target = $region8
  $region5: #{tpu_custom_call.1} parent=0 // loop_body
    %s18 = ssub.s32 %s13, 1
    %s19 = ssub.s32 %s13, 2
    %s20 = sadd.s32 %s13, 1
    %s21 = ssub.s32 %s13, %s20
    %p22 = scmp.eq.s32.totalorder %s21, 0
    %s24 = sadd.s32 %s23, 1
    %s25 = scalar_select %p22, %s23, %s24
    %p28 = pneg %p22
    %p29 = scmp.eq.s32.totalorder %s13, 1
    %p30 = por %p28, %p29
    %p31 = scmp.ne.s32.totalorder %s23, %s26
    %p32 = scmp.eq.s32.totalorder %s13, 0
    %p33 = por %p31, %p32
    %p34 = scmp.ne.s32.totalorder %s23, %s26
    %p35 = scmp.eq.s32.totalorder %s18, 1
    %p36 = por %p34, %p35
    %p37 = scmp.ne.s32.totalorder %s26, %s27
    %p38 = scmp.eq.s32.totalorder %s18, 0
    %p39 = por %p37, %p38
    %p40 = scmp.ne.s32.totalorder %s26, %s27
    %p41 = scmp.eq.s32.totalorder %s19, 1
    %p42 = por %p40, %p41
    %p44 = scmp.ne.s32.totalorder %s27, %s43
    %p45 = scmp.eq.s32.totalorder %s19, 0
    %p46 = por %p44, %p45
    %s48 = sadd.s32 %s47, 1
    %p51 = scmp.eq.s32.totalorder %s13, 1
    %p52 = scmp.ne.s32.totalorder %s47, %s49
    %p53 = scmp.eq.s32.totalorder %s13, 0
    %p54 = por %p52, %p53
    %p55 = scmp.ne.s32.totalorder %s47, %s49
    %p56 = scmp.eq.s32.totalorder %s18, 1
    %p57 = por %p55, %p56
    %p58 = scmp.ne.s32.totalorder %s49, %s50
    %p59 = scmp.eq.s32.totalorder %s18, 0
    %p60 = por %p58, %p59
    %p61 = scmp.ne.s32.totalorder %s49, %s50
    %p62 = scmp.eq.s32.totalorder %s19, 1
    %p63 = por %p61, %p62
    %p65 = scmp.ne.s32.totalorder %s50, %s64
    %p66 = scmp.eq.s32.totalorder %s19, 0
    %p67 = por %p65, %p66
    %s69 = sadd.s32 %s68, 1
    %p72 = scmp.eq.s32.totalorder %s13, 1
    %p73 = scmp.ne.s32.totalorder %s68, %s70
    %p74 = scmp.eq.s32.totalorder %s13, 0
    %p75 = por %p73, %p74
    %p76 = scmp.ne.s32.totalorder %s68, %s70
    %p77 = scmp.eq.s32.totalorder %s18, 1
    %p78 = por %p76, %p77
    %p79 = scmp.ne.s32.totalorder %s70, %s71
    %p80 = scmp.eq.s32.totalorder %s18, 0
    %p81 = por %p79, %p80
    %p82 = scmp.ne.s32.totalorder %s70, %s71
    %p83 = scmp.eq.s32.totalorder %s19, 1
    %p84 = por %p82, %p83
    %p86 = scmp.ne.s32.totalorder %s71, %s85
    %p87 = scmp.eq.s32.totalorder %s19, 0
    %p88 = por %p86, %p87
    %s90 = sadd.s32 %s89, 1
    %p93 = scmp.eq.s32.totalorder %s13, 1
    %p94 = scmp.ne.s32.totalorder %s89, %s91
    %p95 = scmp.eq.s32.totalorder %s13, 0
    %p96 = por %p94, %p95
    %p97 = scmp.ne.s32.totalorder %s89, %s91
    %p98 = scmp.eq.s32.totalorder %s18, 1
    %p99 = por %p97, %p98
    %p100 = scmp.ne.s32.totalorder %s91, %s92
    %p101 = scmp.eq.s32.totalorder %s18, 0
    %p102 = por %p100, %p101
    %p103 = scmp.ne.s32.totalorder %s91, %s92
    %p104 = scmp.eq.s32.totalorder %s19, 1
    %p105 = por %p103, %p104
    %p107 = scmp.ne.s32.totalorder %s92, %s106
    %p108 = scmp.eq.s32.totalorder %s19, 0
    %p109 = por %p107, %p108
    %s111 = sadd.s32 %s110, 1
    %p114 = scmp.eq.s32.totalorder %s13, 1
    %p115 = scmp.ne.s32.totalorder %s110, %s112
    %p116 = scmp.eq.s32.totalorder %s13, 0
    %p117 = por %p115, %p116
    %p118 = scmp.ne.s32.totalorder %s110, %s112
    %p119 = scmp.eq.s32.totalorder %s18, 1
    %p120 = por %p118, %p119
    %p121 = scmp.ne.s32.totalorder %s112, %s113
    %p122 = scmp.eq.s32.totalorder %s18, 0
    %p123 = por %p121, %p122
    %p124 = scmp.ne.s32.totalorder %s112, %s113
    %p125 = scmp.eq.s32.totalorder %s19, 1
    %p126 = por %p124, %p125
    %p128 = scmp.ne.s32.totalorder %s113, %s127
    %p129 = scmp.eq.s32.totalorder %s19, 0
    %p130 = por %p128, %p129
    %s132 = sadd.s32 %s131, 1
    %p135 = scmp.eq.s32.totalorder %s13, 1
    %p136 = scmp.ne.s32.totalorder %s131, %s133
    %p137 = scmp.eq.s32.totalorder %s13, 0
    %p138 = por %p136, %p137
    %p139 = scmp.ne.s32.totalorder %s131, %s133
    %p140 = scmp.eq.s32.totalorder %s18, 1
    %p141 = por %p139, %p140
    %p142 = scmp.ne.s32.totalorder %s133, %s134
    %p143 = scmp.eq.s32.totalorder %s18, 0
    %p144 = por %p142, %p143
    %p145 = scmp.ne.s32.totalorder %s133, %s134
    %p146 = scmp.eq.s32.totalorder %s19, 1
    %p147 = por %p145, %p146
    %p149 = scmp.ne.s32.totalorder %s134, %s148
    %p150 = scmp.eq.s32.totalorder %s19, 0
    %p151 = por %p149, %p150
    %s153 = sadd.s32 %s152, 1
    %p156 = scmp.eq.s32.totalorder %s13, 1
    %p157 = scmp.ne.s32.totalorder %s152, %s154
    %p158 = scmp.eq.s32.totalorder %s13, 0
    %p159 = por %p157, %p158
    %p160 = scmp.ne.s32.totalorder %s152, %s154
    %p161 = scmp.eq.s32.totalorder %s18, 1
    %p162 = por %p160, %p161
    %p163 = scmp.ne.s32.totalorder %s154, %s155
    %p164 = scmp.eq.s32.totalorder %s18, 0
    %p165 = por %p163, %p164
    %p166 = scmp.ne.s32.totalorder %s154, %s155
    %p167 = scmp.eq.s32.totalorder %s19, 1
    %p168 = por %p166, %p167
    %p170 = scmp.ne.s32.totalorder %s155, %s169
    %p171 = scmp.eq.s32.totalorder %s19, 0
    %p172 = por %p170, %p171
    %s173 = ssub.s32 %s13, %s20
    %p174 = scmp.eq.s32.totalorder %s173, 0
    %s176 = sadd.s32 %s175, 1
    %s177 = scalar_select %p174, %s175, %s176
    %p180 = pneg %p174
    %p181 = scmp.eq.s32.totalorder %s13, 1
    %p182 = por %p180, %p181
    %p183 = scmp.ne.s32.totalorder %s175, %s178
    %p184 = scmp.eq.s32.totalorder %s13, 0
    %p185 = por %p183, %p184
    %p186 = scmp.ne.s32.totalorder %s175, %s178
    %p187 = scmp.eq.s32.totalorder %s18, 1
    %p188 = por %p186, %p187
    %p189 = scmp.ne.s32.totalorder %s178, %s179
    %p190 = scmp.eq.s32.totalorder %s18, 0
    %p191 = por %p189, %p190
    %p192 = scmp.ne.s32.totalorder %s178, %s179
    %p193 = scmp.eq.s32.totalorder %s19, 1
    %p194 = por %p192, %p193
    %p196 = scmp.ne.s32.totalorder %s179, %s195
    %p197 = scmp.eq.s32.totalorder %s19, 0
    %p198 = por %p196, %p197
    %p199 = scmp.le.s32.totalorder 1, %s13
    %p200 = scmp.lt.s32.totalorder %s13, 3
    %p201 = pnand %p199, %p200
    %p202 = pneg %p201
    // Predicated region
    $region9: #{tpu_custom_call.1} parent=5 // pred_check
      _
    $region10: #{tpu_custom_call.1} parent=5 // pred_check_branch
      %204 = sbr.rel (%p201) target = $region12
    $region11: #{tpu_custom_call.1} parent=5 // pred_region
      %s205 = ssub.s32 %s13, 1
      // Predicated region
      $region13: #{tpu_custom_call.1} parent=11 // pred_check
        %p206 = pneg %p60
      $region14: #{tpu_custom_call.1} parent=11 // pred_check_branch
        %208 = sbr.rel (%p206) target = $region16
      $region15: #{tpu_custom_call.1} parent=11 // pred_region
        _
      $region16: #{tpu_custom_call.1} parent=11 // pred_fallthru
        _
      // Predicated region
      $region17: #{tpu_custom_call.1} parent=11 // pred_check
        %p209 = pneg %p81
      $region18: #{tpu_custom_call.1} parent=11 // pred_check_branch
        %211 = sbr.rel (%p209) target = $region20
      $region19: #{tpu_custom_call.1} parent=11 // pred_region
        _
      $region20: #{tpu_custom_call.1} parent=11 // pred_fallthru
        _
      // Predicated region
      $region21: #{tpu_custom_call.1} parent=11 // pred_check
        %p212 = pneg %p102
      $region22: #{tpu_custom_call.1} parent=11 // pred_check_branch
        %214 = sbr.rel (%p212) target = $region24
      $region23: #{tpu_custom_call.1} parent=11 // pred_region
        _
      $region24: #{tpu_custom_call.1} parent=11 // pred_fallthru
        _
      // Predicated region
      $region25: #{tpu_custom_call.1} parent=11 // pred_check
        %p215 = pneg %p123
      $region26: #{tpu_custom_call.1} parent=11 // pred_check_branch
        %217 = sbr.rel (%p215) target = $region28
      $region27: #{tpu_custom_call.1} parent=11 // pred_region
        _
      $region28: #{tpu_custom_call.1} parent=11 // pred_fallthru
        _
      // Predicated region
      $region29: #{tpu_custom_call.1} parent=11 // pred_check
        %p218 = pneg %p144
      $region30: #{tpu_custom_call.1} parent=11 // pred_check_branch
        %220 = sbr.rel (%p218) target = $region32
      $region31: #{tpu_custom_call.1} parent=11 // pred_region
        _
      $region32: #{tpu_custom_call.1} parent=11 // pred_fallthru
        _
      // Predicated region
      $region33: #{tpu_custom_call.1} parent=11 // pred_check
        %p221 = pneg %p165
      $region34: #{tpu_custom_call.1} parent=11 // pred_check_branch
        %223 = sbr.rel (%p221) target = $region36
      $region35: #{tpu_custom_call.1} parent=11 // pred_region
        _
      $region36: #{tpu_custom_call.1} parent=11 // pred_fallthru
        _
    $region12: #{tpu_custom_call.1} parent=5 // pred_fallthru
      _
    %p224 = scmp.lt.s32.totalorder %s13, 2
    // Predicated region
    $region37: #{tpu_custom_call.1} parent=5 // pred_check
      %p225 = pneg %p224
    $region38: #{tpu_custom_call.1} parent=5 // pred_check_branch
      %227 = sbr.rel (%p225) target = $region40
    $region39: #{tpu_custom_call.1} parent=5 // pred_region
      // Predicated region
      $region41: #{tpu_custom_call.1} parent=39 // pred_check
        %p228 = pneg %p33
      $region42: #{tpu_custom_call.1} parent=39 // pred_check_branch
        %230 = sbr.rel (%p228) target = $region44
      $region43: #{tpu_custom_call.1} parent=39 // pred_region
        %p231 = scmp.lt.s32.totalorder %s13, 1
        %s232 = scalar_select %p231, %s13, 1
        %s233 = smul.addr %s232, 8
        %s234 = scalar_lea.vmem %s0, %s233
      $region44: #{tpu_custom_call.1} parent=39 // pred_fallthru
        _
    $region40: #{tpu_custom_call.1} parent=5 // pred_fallthru
      _
    %p235 = scmp.le.s32.totalorder 1, %s13
    %p236 = scmp.lt.s32.totalorder %s13, 3
    %p237 = pnand %p235, %p236
    %p238 = pneg %p237
    // Predicated region
    $region45: #{tpu_custom_call.1} parent=5 // pred_check
      _
    $region46: #{tpu_custom_call.1} parent=5 // pred_check_branch
      %240 = sbr.rel (%p237) target = $region48
    $region47: #{tpu_custom_call.1} parent=5 // pred_region
      %s241 = ssub.s32 %s13, 1
      %p242 = scmp.lt.s32.totalorder %s18, 1
      %s243 = scalar_select %p242, %s18, 1
      %s244 = smul.addr %s243, 8
      %s245 = scalar_lea.vmem %s0, %s244
      %p246 = pneg %p39
      %p247 = pneg %p36
      %p248 = pneg %p60
      %p249 = pneg %p57
      %p250 = pneg %p81
      %p251 = pneg %p78
      %p252 = pneg %p102
      %p253 = pneg %p99
      %p254 = pneg %p123
      %p255 = pneg %p120
      %p256 = pneg %p144
      %p257 = pneg %p141
      %p258 = pneg %p165
      %p259 = pneg %p162
      %p260 = pneg %p191
      %p261 = pneg %p188
      %p262 = scmp.lt.s32.totalorder %s18, 1
      %s263 = scalar_select %p262, %s18, 1
      %s264 = smul.addr %s263, 8
      %s265 = scalar_lea.vmem %s7, %s264
      %p266 = scmp.lt.s32.totalorder %s18, 1
      %s267 = scalar_select %p266, %s18, 1
      %s268 = smul.addr %s267, 8
      %s269 = scalar_lea.vmem %s0, %s268
      %p270 = scmp.lt.s32.totalorder %s18, 1
      %s271 = scalar_select %p270, %s18, 1
      %s272 = smul.addr %s271, 8
      %s273 = scalar_lea.vmem %s7, %s272
      %v275 = vld [vmem:[%s269] sm:$0xff]
      %v276 = vld [vmem:[%s1] sm:$0xf]
      %v277 = vld [vmem:[%s1 + $0x4] sm:$0xf]
      %v278 = vld [vmem:[%s1 + $0x8] sm:$0xf]
      %v279 = vld [vmem:[%s1 + $0xc] sm:$0xf]
      %v280 = vld [vmem:[%s2] sm:$0x1]
      %v281 = vpack.c.bf16 %v275, %v275
      %v283 = vperm.slane %v280, 0
      %v289 = vunpack.c.l.b16 %v276
      %v290 = vunpack.c.l.b16 %v277
      %v291 = vunpack.c.l.b16 %v278
      %v292 = vunpack.c.l.b16 %v279
      %v293 = vpack.c.b16 %v290, %v289
      %v294 = vpack.c.b16 %v292, %v291
      %vm297 = vcmask 261120
      %v299 = vsel %vm297, %v281, 0
      %301 = vmatpush.bf16.msra.mxu0 0
      %302 = vmatpush.bf16.msra.mxu0 0
      %303 = vmatpush.bf16.msra.mxu0 0
      %304 = vmatpush.bf16.msra.mxu0 0
      %305 = vmatpush.bf16.msra.mxu0 0
      %306 = vmatpush.bf16.msra.mxu0 0
      %307 = vmatpush.bf16.msra.mxu0 %v294
      %308 = vmatpush.bf16.msra.mxu0 %v293
      %309 = vmatmul.bf16.gmra.mxu0 %v299
      %v310 = vpop.f32.mrf.mxu0
      %v311 = vadd.f32 %v283, %v310
      %v312 = vpop.f32.mrf.mxu0
      %313 = vdwg.mxu0
      %vm314 = vcmp.gt.f32.partialorder %v311, 0.0
      %v315 = vmul.f32 %v311, 0.01
      %v316 = vsel %vm314, %v311, %v315
      %v317 = vadd.f32 %v316, %v275
      %v318 = vld [vmem:[%s3] sm:$0xff]
      %v319 = vld [vmem:[%s3 + $0x8] sm:$0xff]
      %v320 = vld [vmem:[%s3 + $0x10] sm:$0xff]
      %v321 = vld [vmem:[%s3 + $0x18] sm:$0xff]
      %v322 = vld [vmem:[%s4] sm:$0x1]
      %v323 = vpack.c.bf16 %v317, %v317
      %v328 = vunpack.c.l.b16 %v318
      %v329 = vunpack.c.h.b16 %v318
      %v330 = vunpack.c.l.b16 %v319
      %v331 = vunpack.c.h.b16 %v319
      %v332 = vunpack.c.l.b16 %v320
      %v333 = vunpack.c.h.b16 %v320
      %v334 = vunpack.c.l.b16 %v321
      %v335 = vunpack.c.h.b16 %v321
      %v336 = vpack.c.b16 %v330, %v328
      %v337 = vpack.c.b16 %v331, %v329
      %v338 = vpack.c.b16 %v334, %v332
      %v339 = vpack.c.b16 %v335, %v333
      %v345 = vsel %vm297, %v323, 0
      %347 = vmatpush.bf16.msra.mxu0 0
      %348 = vmatpush.bf16.msra.mxu0 0
      %349 = vmatpush.bf16.msra.mxu0 0
      %350 = vmatpush.bf16.msra.mxu0 0
      %351 = vmatpush.bf16.msra.mxu0 0
      %352 = vmatpush.bf16.msra.mxu0 0
      %353 = vmatpush.bf16.msra.mxu0 %v338
      %354 = vmatpush.bf16.msra.mxu0 %v336
      %355 = vmatmul.bf16.gmra.mxu0 %v345
      %v356 = vpop.f32.mrf.mxu0
      %v357 = vadd.f32 0.0, %v356
      %v358 = vpop.f32.mrf.mxu0
      %359 = vdwg.mxu0
      %360 = vmatpush.bf16.msra.mxu0 0
      %361 = vmatpush.bf16.msra.mxu0 0
      %362 = vmatpush.bf16.msra.mxu0 0
      %363 = vmatpush.bf16.msra.mxu0 0
      %364 = vmatpush.bf16.msra.mxu0 0
      %365 = vmatpush.bf16.msra.mxu0 0
      %366 = vmatpush.bf16.msra.mxu0 %v339
      %367 = vmatpush.bf16.msra.mxu0 %v337
      %368 = vmatmul.bf16.gmra.mxu0 %v345
      %v369 = vpop.f32.mrf.mxu0
      %v370 = vadd.f32 0.0, %v369
      %v371 = vpop.f32.mrf.mxu0
      %372 = vdwg.mxu0
      %v374 = vperm.slane %v322, 0
      %v376 = vadd.f32 %v357, %v374
      %vm377 = vcmp.gt.f32.partialorder %v376, 0.0
      %v378 = vmul.f32 %v376, 0.01
      %v379 = vsel %vm377, %v376, %v378
      %v380 = vadd.f32 %v379, %v370
      %v381 = vld [vmem:[%s5] sm:$0xf]
      %v382 = vld [vmem:[%s5 + $0x4] sm:$0xf]
      %v383 = vld [vmem:[%s5 + $0x8] sm:$0xf]
      %v384 = vld [vmem:[%s5 + $0xc] sm:$0xf]
      %v385 = vld [vmem:[%s5 + $0x10] sm:$0xf]
      %v386 = vld [vmem:[%s5 + $0x14] sm:$0xf]
      %v387 = vld [vmem:[%s5 + $0x18] sm:$0xf]
      %v388 = vld [vmem:[%s5 + $0x1c] sm:$0xf]
      %v389 = vld [vmem:[%s5 + $0x20] sm:$0xf]
      %v390 = vld [vmem:[%s5 + $0x24] sm:$0xf]
      %v391 = vld [vmem:[%s5 + $0x28] sm:$0xf]
      %v392 = vld [vmem:[%s5 + $0x2c] sm:$0xf]
      %v393 = vld [vmem:[%s5 + $0x30] sm:$0xf]
      %v394 = vld [vmem:[%s5 + $0x34] sm:$0xf]
      %v395 = vld [vmem:[%s5 + $0x38] sm:$0xf]
      %v396 = vld [vmem:[%s5 + $0x3c] sm:$0xf]
      %v397 = vld [vmem:[%s6] sm:$0x1]
      %v398 = vpack.c.bf16 %v380, %v380
      %v400 = vperm.slane %v397, 0
      %v418 = vunpack.c.l.b16 %v381
      %v419 = vunpack.c.l.b16 %v382
      %v420 = vunpack.c.l.b16 %v383
      %v421 = vunpack.c.l.b16 %v384
      %v422 = vunpack.c.l.b16 %v385
      %v423 = vunpack.c.l.b16 %v386
      %v424 = vunpack.c.l.b16 %v387
      %v425 = vunpack.c.l.b16 %v388
      %v426 = vunpack.c.l.b16 %v389
      %v427 = vunpack.c.l.b16 %v390
      %v428 = vunpack.c.l.b16 %v391
      %v429 = vunpack.c.l.b16 %v392
      %v430 = vunpack.c.l.b16 %v393
      %v431 = vunpack.c.l.b16 %v394
      %v432 = vunpack.c.l.b16 %v395
      %v433 = vunpack.c.l.b16 %v396
      %v434 = vpack.c.b16 %v419, %v418
      %v435 = vpack.c.b16 %v421, %v420
      %v436 = vpack.c.b16 %v423, %v422
      %v437 = vpack.c.b16 %v425, %v424
      %v438 = vpack.c.b16 %v427, %v426
      %v439 = vpack.c.b16 %v429, %v428
      %v440 = vpack.c.b16 %v431, %v430
      %v441 = vpack.c.b16 %v433, %v432
      %450 = vmatpush.bf16.msra.mxu0 %v441
      %451 = vmatpush.bf16.msra.mxu0 %v440
      %452 = vmatpush.bf16.msra.mxu0 %v439
      %453 = vmatpush.bf16.msra.mxu0 %v438
      %454 = vmatpush.bf16.msra.mxu0 %v437
      %455 = vmatpush.bf16.msra.mxu0 %v436
      %456 = vmatpush.bf16.msra.mxu0 %v435
      %457 = vmatpush.bf16.msra.mxu0 %v434
      %458 = vmatmul.bf16.gmra.mxu0 %v398
      %v459 = vpop.f32.mrf.mxu0
      %v460 = vadd.f32 %v400, %v459
      %v461 = vpop.f32.mrf.mxu0
      %462 = vdwg.mxu0
      %vm463 = vcmask 64512
      %464 = vst.msk [vmem:[%s273] sm:$0xff] %vm463, %v460
      %p465 = scmp.lt.s32.totalorder %s18, 1
      %s466 = scalar_select %p465, %s18, 1
      %s467 = smul.addr %s466, 8
      %s468 = scalar_lea.vmem %s7, %s467
      // Predicated region
      $region49: #{tpu_custom_call.1} parent=47 // pred_check
        %p469 = pneg %p188
      $region50: #{tpu_custom_call.1} parent=47 // pred_check_branch
        %471 = sbr.rel (%p469) target = $region52
      $region51: #{tpu_custom_call.1} parent=47 // pred_region
        _
      $region52: #{tpu_custom_call.1} parent=47 // pred_fallthru
        _
    $region48: #{tpu_custom_call.1} parent=5 // pred_fallthru
      _
    %p472 = scmp.le.s32.totalorder 2, %s13
    // Predicated region
    $region53: #{tpu_custom_call.1} parent=5 // pred_check
      %p473 = pneg %p472
    $region54: #{tpu_custom_call.1} parent=5 // pred_check_branch
      %475 = sbr.rel (%p473) target = $region56
    $region55: #{tpu_custom_call.1} parent=5 // pred_region
      %s476 = ssub.s32 %s13, 2
      // Predicated region
      $region57: #{tpu_custom_call.1} parent=55 // pred_check
        %p477 = pneg %p194
      $region58: #{tpu_custom_call.1} parent=55 // pred_check_branch
        %479 = sbr.rel (%p477) target = $region60
      $region59: #{tpu_custom_call.1} parent=55 // pred_region
        %p480 = scmp.lt.s32.totalorder %s19, 1
        %s481 = scalar_select %p480, %s19, 1
        %s482 = smul.addr %s481, 8
        %s483 = scalar_lea.vmem %s7, %s482
      $region60: #{tpu_custom_call.1} parent=55 // pred_fallthru
        _
    $region56: #{tpu_custom_call.1} parent=5 // pred_fallthru
      _
  $region6: #{tpu_custom_call.1} parent=0 // loop_footer
    %s17 = sadd.s32 1, %s13
  $region7: #{tpu_custom_call.1} parent=0 // loop_footer_branch
    %12 = sbr.rel target = $region3
  $region8: #{tpu_custom_call.1} parent=0 // loop_exit
    _

</llo_original>
